<compile_context>
chip_gen: v6e
topology: v6e:2x2x1
jax: 0.10.0
libtpu: 0.0.40
codegen_flags: <defaults>
</compile_context>

<pallas_src>
import functools

import jax
import jax.numpy as jnp
from jax.experimental import pallas as pl
from jax.experimental.pallas import tpu as pltpu


def attention_kernel(enc_ref, att2_ref, we_ref, wf_ref, awe_ref, alpha_ref,
                     *, n_actual):
    # enc_ref:  (Bt, Np, E)  input dtype (e.g. bf16 or f32)
    # att2_ref: (Bt, A)      f32, decoder projection with be+bd pre-folded
    # we_ref:   (E, A)       input dtype
    # wf_ref:   (1, A)       f32
    # awe_ref:  (Bt, E)      alpha_ref: (Bt, Np)
    bt, n, e_dim = enc_ref.shape
    a_dim = we_ref.shape[1]

    enc = enc_ref[...]                                        # (Bt, Np, E)

    # encoder_att: one MXU matmul with M = Bt*Np rows, f32 accumulation.
    att1 = jnp.dot(enc.reshape(bt * n, e_dim), we_ref[...],
                   preferred_element_type=jnp.float32)        # (Bt*Np, A) f32

    # relu(att1 + att2.unsqueeze(1)); both Linear biases already folded in att2.
    h = jnp.maximum(att1.reshape(bt, n, a_dim) + att2_ref[...][:, None, :],
                    0.0)                                      # (Bt, Np, A) f32

    # full_att: VPU mul by the (1, A) weight + lane-axis reduce.  Keeps the MXU
    # free (an (A, 1) matvec would use a single MXU column + a relayout).
    scores = jnp.sum(h * wf_ref[...], axis=-1)                # (Bt, Np) f32
    # (The full_att bias cancels in the softmax, so it is intentionally absent.)

    # Mask padded pixel lanes so they get exactly zero attention weight.
    if n_actual < n:
        lane = jax.lax.broadcasted_iota(jnp.int32, (bt, n), 1)
        scores = jnp.where(lane < n_actual, scores, -1e30)

    # Stable softmax over pixels (lane axis).
    m = jnp.max(scores, axis=-1, keepdims=True)               # (Bt, 1)
    e = jnp.exp(scores - m)                                   # (Bt, Np)
    denom = jnp.sum(e, axis=-1, keepdims=True)                # (Bt, 1)
    alpha = e * pl.reciprocal(denom, approx=False)            # (Bt, Np) f32

    # attention_weighted_encoding: VPU broadcast-mul + sublane-axis reduce.
    awe = jnp.sum(enc.astype(jnp.float32) * alpha[:, :, None], axis=1)  # (Bt, E)

    awe_ref[...] = awe.astype(awe_ref.dtype)
    alpha_ref[...] = alpha.astype(alpha_ref.dtype)


def _has_two_tensorcores():
    try:
        return "v7" in jax.devices()[0].device_kind.lower()
    except Exception:  # pragma: no cover
        return False


def _pick_block_b(batch, n_pad, e_dim, a_dim, in_itemsize,
                  vmem_budget_bytes=24 << 20, two_tc=False):
    """Largest batch tile whose per-step VMEM footprint fits the budget.

    Budget is kept under the 32 MiB default scoped-VMEM limit (v6e/v7x) so no
    vmem_limit_bytes override is needed.  On two-TC chips (v7x) prefer an even
    number of grid steps; on single-TC chips just take the biggest tile.
    """
    # Grid-invariant operands (We double-buffered by default, wf + att2 small).
    static = 2 * e_dim * a_dim * in_itemsize + 4 * a_dim * 4
    budget = max(vmem_budget_bytes - static, 1 << 20)

    def step_bytes(bt):
        enc = 2 * bt * n_pad * e_dim * in_itemsize        # double-buffered encoder tile
        att2 = 2 * bt * a_dim * 4
        inter = 2 * bt * n_pad * a_dim * 4                # att1 + h live f32 values
        outs = 2 * (bt * e_dim + bt * n_pad) * 4
        return enc + att2 + inter + outs

    divisors = [d for d in range(1, batch + 1) if batch % d == 0]
    fitting = [d for d in divisors if step_bytes(d) <= budget] or [1]
    if two_tc:
        even = [d for d in fitting if (batch // d) % 2 == 0]
        if even:
            return max(even)
    return max(fitting)


def attention_forward(encoder_out, decoder_hidden, params, block_b=None):
    """Returns (attention_weighted_encoding (B, E), alpha (B, N))."""
    B, N, E = encoder_out.shape
    A = params["we"].shape[1]

    in_dtype = encoder_out.dtype
    itemsize = encoder_out.dtype.itemsize
    sub = {4: 8, 2: 16, 1: 32}.get(itemsize, 8)

    # Pad the pixel axis to the sublane pack so the in-kernel reshapes are
    # layout no-ops; padded lanes are masked inside the kernel.
    n_pad = ((N + sub - 1) // sub) * sub
    if n_pad != N:
        encoder_out = jnp.pad(encoder_out, ((0, 0), (0, n_pad - N), (0, 0)))

    we = params["we"].astype(in_dtype)                          # (E, A)
    wf = params["wf"].reshape(1, A).astype(jnp.float32)         # (1, A)

    # Decoder projection hoisted to XLA (runs once at M=B instead of M=block_b
    # per grid step) with both biases pre-folded.  bf is dropped: it cancels in
    # the softmax, so neither output depends on it.
    att2p = (jnp.dot(decoder_hidden, params["wd"],
                     preferred_element_type=jnp.float32)
             + (params["bd"] + params["be"]).astype(jnp.float32))  # (B, A) f32

    if block_b is None:
        block_b = _pick_block_b(B, n_pad, E, A, itemsize,
                                two_tc=_has_two_tensorcores())
    assert B % block_b == 0, "block_b must divide the batch"
    grid = (B // block_b,)

    kernel = functools.partial(attention_kernel, n_actual=N)

    awe, alpha_p = pl.pallas_call(
        kernel,
        out_shape=(
            jax.ShapeDtypeStruct((B, E), in_dtype),
            jax.ShapeDtypeStruct((B, n_pad), in_dtype),
        ),
        grid_spec=pltpu.PrefetchScalarGridSpec(
            num_scalar_prefetch=0,
            grid=grid,
            in_specs=[
                pl.BlockSpec((block_b, n_pad, E), lambda b: (b, 0, 0)),  # encoder_out
                pl.BlockSpec((block_b, A), lambda b: (b, 0)),            # att2 (+bias)
                pl.BlockSpec((E, A), lambda b: (0, 0)),                  # W_enc
                pl.BlockSpec((1, A), lambda b: (0, 0)),                  # w_full
            ],
            out_specs=[
                pl.BlockSpec((block_b, E), lambda b: (b, 0)),            # weighted enc
                pl.BlockSpec((block_b, n_pad), lambda b: (b, 0)),        # alpha
            ],
        ),
        compiler_params=pltpu.CompilerParams(
            dimension_semantics=("parallel",)),
    )(encoder_out, att2p, we, wf)
    # TODO(synk): single-buffer the grid-invariant We block (pipeline_mode) once
    # that path is load-bearing; at current shapes the double-buffer is tiny.

    alpha = alpha_p[:, :N] if n_pad != N else alpha_p
    return awe, alpha


def attention_ref(encoder_out, decoder_hidden, params):
    """Pure-JAX f32 reference mirroring the PyTorch forward exactly."""
    enc = encoder_out.astype(jnp.float32)
    dec = decoder_hidden.astype(jnp.float32)
    p = {k: v.astype(jnp.float32) for k, v in params.items()}
    att1 = enc @ p["we"] + p["be"]                                  # (B, N, A)
    att2 = dec @ p["wd"] + p["bd"]                                  # (B, A)
    h = jnp.maximum(att1 + att2[:, None, :], 0.0)                   # (B, N, A)
    att = jnp.einsum("bna,a->bn", h, p["wf"]) + p["bf"]             # (B, N)
    alpha = jax.nn.softmax(att, axis=1)                             # (B, N)
    awe = jnp.sum(enc * alpha[:, :, None], axis=1)                  # (B, E)
    return awe, alpha


if __name__ == "__main__":
    B, N = 2, 16           # batch, num_pixels
    E, D, A = 32, 24, 48   # encoder_dim, decoder_dim, attention_dim

    key = jax.random.PRNGKey(0)
    k_enc, k_dec, k1, k2, k3, k4, k5, k6 = jax.random.split(key, 8)

    encoder_out = jax.random.normal(k_enc, (B, N, E), dtype=jnp.float32)
    decoder_hidden = jax.random.normal(k_dec, (B, D), dtype=jnp.float32)

    # Parameters stored transposed relative to torch.nn.Linear ((in, out)).
    params = {
        "we": jax.random.normal(k1, (E, A), dtype=jnp.float32) * 0.1,
        "be": jax.random.normal(k2, (A,), dtype=jnp.float32) * 0.1,
        "wd": jax.random.normal(k3, (D, A), dtype=jnp.float32) * 0.1,
        "bd": jax.random.normal(k4, (A,), dtype=jnp.float32) * 0.1,
        "wf": jax.random.normal(k5, (A,), dtype=jnp.float32) * 0.1,
        "bf": jax.random.normal(k6, (), dtype=jnp.float32) * 0.1,
    }

    # 1) f32 path — exact check against the reference.
    awe, alpha = attention_forward(encoder_out, decoder_hidden, params)
    jax.block_until_ready((awe, alpha))
    awe_r, alpha_r = attention_ref(encoder_out, decoder_hidden, params)
    assert awe.shape == (B, E) and alpha.shape == (B, N)
    assert jnp.allclose(awe, awe_r, atol=1e-5, rtol=1e-5), "awe mismatch (f32)"
    assert jnp.allclose(alpha, alpha_r, atol=1e-5, rtol=1e-5), "alpha mismatch (f32)"

    # 2) Non-multiple-of-8 pixel count — exercises the pad + softmax-mask path.
    enc12 = jax.random.normal(k_enc, (B, 12, E), dtype=jnp.float32)
    awe12, alpha12 = attention_forward(enc12, decoder_hidden, params)
    jax.block_until_ready((awe12, alpha12))
    awe12_r, alpha12_r = attention_ref(enc12, decoder_hidden, params)
    assert alpha12.shape == (B, 12)
    assert jnp.allclose(awe12, awe12_r, atol=1e-5, rtol=1e-5), "awe mismatch (pad)"
    assert jnp.allclose(alpha12, alpha12_r, atol=1e-5, rtol=1e-5), "alpha mismatch (pad)"

    # 3) bf16 path — native MXU dtype end-to-end with f32 accumulation.
    params_bf = {k: v.astype(jnp.bfloat16) for k, v in params.items()}
    awe_bf, alpha_bf = attention_forward(
        encoder_out.astype(jnp.bfloat16), decoder_hidden.astype(jnp.bfloat16),
        params_bf)
    jax.block_until_ready((awe_bf, alpha_bf))
    assert awe_bf.dtype == jnp.bfloat16 and alpha_bf.dtype == jnp.bfloat16
    assert jnp.allclose(awe_bf.astype(jnp.float32), awe_r, atol=7e-2, rtol=7e-2), \
        "awe mismatch (bf16)"
    assert jnp.allclose(alpha_bf.astype(jnp.float32), alpha_r, atol=2e-2, rtol=2e-2), \
        "alpha mismatch (bf16)"

    print("KERNEL_OK")
</pallas_src>

<mosaic_0001>
module attributes {stable_mosaic.version = 11 : i64} {
  func.func @attention_kernel(%arg0: i32, %arg1: memref<2x16x32xf32, #tpu.memory_space<vmem>>, %arg2: memref<2x48xf32, #tpu.memory_space<vmem>>, %arg3: memref<32x48xf32, #tpu.memory_space<vmem>>, %arg4: memref<1x48xf32, #tpu.memory_space<vmem>>, %arg5: memref<2x32xf32, #tpu.memory_space<vmem>>, %arg6: memref<2x16xf32, #tpu.memory_space<vmem>>) attributes {dimension_semantics = [#tpu.dimension_semantics<parallel>], iteration_bounds = array<i64: 1>, scalar_prefetch = 0 : i64, scratch_operands = 0 : i64, tpu.core_type = #tpu.core_type<tc>, window_params = [{transform_indices = @transform_0, window_bounds = array<i64: 2, 16, 32>}, {transform_indices = @transform_1, window_bounds = array<i64: 2, 48>}, {pipeline_mode = #tpu.pipeline_mode<synchronous>, transform_indices = @transform_2, window_bounds = array<i64: 32, 48>}, {pipeline_mode = #tpu.pipeline_mode<synchronous>, transform_indices = @transform_3, window_bounds = array<i64: 1, 48>}, {transform_indices = @transform_4, window_bounds = array<i64: 2, 32>}, {transform_indices = @transform_5, window_bounds = array<i64: 2, 16>}]} {
    %c0 = arith.constant 0 : index
    %c0_0 = arith.constant 0 : index
    %c0_1 = arith.constant 0 : index
    %0 = vector.load %arg1[%c0, %c0_0, %c0_1] : memref<2x16x32xf32, #tpu.memory_space<vmem>>, vector<2x16x32xf32>
    %1 = vector.shape_cast %0 : vector<2x16x32xf32> to vector<32x32xf32>
    %c0_2 = arith.constant 0 : index
    %c0_3 = arith.constant 0 : index
    %2 = vector.load %arg3[%c0_2, %c0_3] : memref<32x48xf32, #tpu.memory_space<vmem>>, vector<32x48xf32>
    %cst = arith.constant dense<0.000000e+00> : vector<32x48xf32>
    %3 = tpu.matmul %1, %2, %cst {dimension_numbers = #tpu.dot_dimension_numbers<[1], [0], [0], [1], [0, 0, 1, 1], [], []>} : vector<32x32xf32>, vector<32x48xf32>, vector<32x48xf32> -> vector<32x48xf32>
    %4 = vector.shape_cast %3 : vector<32x48xf32> to vector<2x16x48xf32>
    %c0_4 = arith.constant 0 : index
    %c0_5 = arith.constant 0 : index
    %5 = vector.load %arg2[%c0_4, %c0_5] : memref<2x48xf32, #tpu.memory_space<vmem>>, vector<2x48xf32>
    %6 = vector.shape_cast %5 : vector<2x48xf32> to vector<2x1x48xf32>
    %7 = vector.broadcast %6 : vector<2x1x48xf32> to vector<2x16x48xf32>
    %8 = arith.addf %4, %7 : vector<2x16x48xf32>
    %cst_6 = arith.constant 0.000000e+00 : f32
    %9 = vector.broadcast %cst_6 : f32 to vector<2x16x48xf32>
    %10 = arith.maximumf %8, %9 : vector<2x16x48xf32>
    %c0_7 = arith.constant 0 : index
    %c0_8 = arith.constant 0 : index
    %11 = vector.load %arg4[%c0_7, %c0_8] : memref<1x48xf32, #tpu.memory_space<vmem>>, vector<1x48xf32>
    %12 = vector.shape_cast %11 : vector<1x48xf32> to vector<1x1x48xf32>
    %13 = vector.broadcast %12 : vector<1x1x48xf32> to vector<2x16x48xf32>
    %14 = arith.mulf %10, %13 : vector<2x16x48xf32>
    %cst_9 = arith.constant dense<0.000000e+00> : vector<2x16xf32>
    %15 = vector.multi_reduction <add>, %14, %cst_9 [2] : vector<2x16x48xf32> to vector<2x16xf32>
    %cst_10 = arith.constant dense<0xFF800000> : vector<2xf32>
    %16 = vector.multi_reduction <maximumf>, %15, %cst_10 [1] : vector<2x16xf32> to vector<2xf32>
    %17 = vector.shape_cast %16 : vector<2xf32> to vector<2x1xf32>
    %18 = vector.broadcast %17 : vector<2x1xf32> to vector<2x16xf32>
    %19 = arith.subf %15, %18 : vector<2x16xf32>
    %20 = math.exp %19 : vector<2x16xf32>
    %cst_11 = arith.constant dense<0.000000e+00> : vector<2xf32>
    %21 = vector.multi_reduction <add>, %20, %cst_11 [1] : vector<2x16xf32> to vector<2xf32>
    %22 = vector.shape_cast %21 : vector<2xf32> to vector<2x1xf32>
    %23 = tpu.reciprocal %22 : vector<2x1xf32> -> vector<2x1xf32>
    %24 = vector.broadcast %23 : vector<2x1xf32> to vector<2x16xf32>
    %25 = arith.mulf %20, %24 : vector<2x16xf32>
    %26 = vector.shape_cast %25 : vector<2x16xf32> to vector<2x16x1xf32>
    %27 = vector.broadcast %26 : vector<2x16x1xf32> to vector<2x16x32xf32>
    %28 = arith.mulf %0, %27 : vector<2x16x32xf32>
    %cst_12 = arith.constant dense<0.000000e+00> : vector<2x32xf32>
    %29 = vector.multi_reduction <add>, %28, %cst_12 [1] : vector<2x16x32xf32> to vector<2x32xf32>
    %c0_13 = arith.constant 0 : index
    %c0_14 = arith.constant 0 : index
    %30 = vector.load %arg5[%c0_13, %c0_14] : memref<2x32xf32, #tpu.memory_space<vmem>>, vector<2x32xf32>
    tpu.vector_store %arg5[%c0_13, %c0_14], %29 {strides = array<i32>} : memref<2x32xf32, #tpu.memory_space<vmem>>, vector<2x32xf32>,
    %c0_15 = arith.constant 0 : index
    %c0_16 = arith.constant 0 : index
    %31 = vector.load %arg6[%c0_15, %c0_16] : memref<2x16xf32, #tpu.memory_space<vmem>>, vector<2x16xf32>
    tpu.vector_store %arg6[%c0_15, %c0_16], %25 {strides = array<i32>} : memref<2x16xf32, #tpu.memory_space<vmem>>, vector<2x16xf32>,
    return
  }
  func.func @transform_0(%arg0: i32) -> (i32, i32, i32) {
    %c0_i32 = arith.constant 0 : i32
    %c0_i32_0 = arith.constant 0 : i32
    %c0_i32_1 = arith.constant 0 : i32
    return %arg0, %c0_i32, %c0_i32_0 : i32, i32, i32
  }
  func.func @transform_1(%arg0: i32) -> (i32, i32) {
    %c0_i32 = arith.constant 0 : i32
    %c0_i32_0 = arith.constant 0 : i32
    return %arg0, %c0_i32 : i32, i32
  }
  func.func @transform_2(%arg0: i32) -> (i32, i32) {
    %c0_i32 = arith.constant 0 : i32
    %c0_i32_0 = arith.constant 0 : i32
    %c0_i32_1 = arith.constant 0 : i32
    return %c0_i32, %c0_i32_0 : i32, i32
  }
  func.func @transform_3(%arg0: i32) -> (i32, i32) {
    %c0_i32 = arith.constant 0 : i32
    %c0_i32_0 = arith.constant 0 : i32
    %c0_i32_1 = arith.constant 0 : i32
    return %c0_i32, %c0_i32_0 : i32, i32
  }
  func.func @transform_4(%arg0: i32) -> (i32, i32) {
    %c0_i32 = arith.constant 0 : i32
    %c0_i32_0 = arith.constant 0 : i32
    return %arg0, %c0_i32 : i32, i32
  }
  func.func @transform_5(%arg0: i32) -> (i32, i32) {
    %c0_i32 = arith.constant 0 : i32
    %c0_i32_0 = arith.constant 0 : i32
    return %arg0, %c0_i32 : i32, i32
  }
}

</mosaic_0001>

<llo_original>
// kernel: tpu_custom_call.1
$region0: #{tpu_custom_call.1}
  #allocation0 [shape = 'u32[]', space=smem, size = 0x4, offset = 0x4, fixed_abs, tag = 'smem constant byte address 0x4 - core index']
  #allocation1 [shape = 'u32[144,128]{1,0:T(1,128)}', space=vmem, size = 0x12000, scoped, tag = 'internal scratch']
  %s0 = inlined_call_operand.hbm [shape: f32[2,16,32], index: 0, kind: input, shape index: {}]
  %s1 = inlined_call_operand.hbm [shape: f32[2,48], index: 1, kind: input, shape index: {}]
  %s2 = inlined_call_operand.hbm [shape: f32[32,48], index: 2, kind: input, shape index: {}]
  %s3 = inlined_call_operand.vmem [shape: f32[1,48], index: 3, kind: input, shape index: {}]
  %s4 = inlined_call_operand.hbm [shape: f32[2,32], index: 4, kind: output, shape index: {0}]
  %s5 = inlined_call_operand.hbm [shape: f32[2,16], index: 5, kind: output, shape index: {1}]
  %6 = xla_tuple %s4, %s5
  %s7 = sld [smem:[#allocation0]]
  $region46: #{tpu_custom_call.1} parent=0
    _
  %s9 = ssub.s32 1, %s7
  %s10 = scalar_select 0, %s9, %s7
  $region1: #{tpu_custom_call.1} parent=0
    #allocation2 [shape = 'u8[16384]{0}', space=vmem, size = 0x4000, scoped, tag = 'input window, operand 0, single buffered']
    #allocation3 [shape = 's32[1]{0}', space=sflag, size = 0x4, scoped, tag = 'scoped memory for tpu_custom_call.1']
    #allocation4 [shape = 's32[1]{0}', space=sflag, size = 0x4, scoped, tag = 'scoped memory for tpu_custom_call.1']
    #allocation5 [shape = 'u8[1024]{0}', space=vmem, size = 0x400, scoped, tag = 'input window, operand 1, single buffered']
    #allocation6 [shape = 's32[1]{0}', space=sflag, size = 0x4, scoped, tag = 'scoped memory for tpu_custom_call.1']
    #allocation7 [shape = 'u8[16384]{0}', space=vmem, size = 0x4000, scoped, tag = 'input window, operand 2, single buffered']
    #allocation8 [shape = 'u8[1024]{0}', space=vmem, size = 0x400, scoped, tag = 'output window, operand 0, single buffered']
    #allocation9 [shape = 'u8[1024]{0}', space=vmem, size = 0x400, scoped, tag = 'output window, operand 1, single buffered']
    #allocation10 [shape = 's32[1]{0}', space=sflag, size = 0x4, scoped, tag = 'scoped memory for tpu_custom_call.1']
    %11 = vsyncpa [#allocation3], 0
    %12 = vsyncpa [#allocation6], 0
    %13 = vsyncpa [#allocation4], 0
    %14 = vsyncpa [#allocation10], 0
    // Predicated region
    $region2: #{tpu_custom_call.1} parent=1 // pred_check
      _
    $region3: #{tpu_custom_call.1} parent=1 // pred_check_branch
      %16 = sbr.rel (0) target = $region5
    $region4: #{tpu_custom_call.1} parent=1 // pred_region
      %s18 = ssub.s32 512, 512
      %19 = vsyncadd [#allocation3], %s18
      %s20 = sshll.u32 [#allocation2], 4
      %s21 = int_to_ptr.vmem [resolvable:$true] %s20
      %26 = dma.hbm_to_vmem [thread:$0]  %s0, 512, %s21, [#allocation3], 128, 128, 8
    $region5: #{tpu_custom_call.1} parent=1 // pred_fallthru
      _
    // Predicated region
    $region6: #{tpu_custom_call.1} parent=1 // pred_check
      _
    $region7: #{tpu_custom_call.1} parent=1 // pred_check_branch
      %28 = sbr.rel (0) target = $region9
    $region8: #{tpu_custom_call.1} parent=1 // pred_region
      %s30 = ssub.s32 32, 32
      %31 = vsyncadd [#allocation6], %s30
      %s33 = sshll.u32 [#allocation5], 4
      %s34 = int_to_ptr.vmem [resolvable:$true] %s33
      %36 = dma.hbm_to_vmem [thread:$0]  %s1, 32, %s34, [#allocation6]
    $region9: #{tpu_custom_call.1} parent=1 // pred_fallthru
      _
    // Predicated region
    $region10: #{tpu_custom_call.1} parent=1 // pred_check
      _
    $region11: #{tpu_custom_call.1} parent=1 // pred_check_branch
      %38 = sbr.rel (0) target = $region13
    $region12: #{tpu_custom_call.1} parent=1 // pred_region
      %s40 = ssub.s32 512, 512
      %41 = vsyncadd [#allocation6], %s40
      %s42 = sshll.u32 [#allocation7], 4
      %s43 = int_to_ptr.vmem [resolvable:$true] %s42
      %48 = dma.hbm_to_vmem [thread:$0]  %s2, 512, %s43, [#allocation6], 128, 128, 8
    $region13: #{tpu_custom_call.1} parent=1 // pred_fallthru
      _
    // Predicated region
    $region14: #{tpu_custom_call.1} parent=1 // pred_check
      _
    $region15: #{tpu_custom_call.1} parent=1 // pred_check_branch
      %50 = sbr.rel (0) target = $region17
    $region16: #{tpu_custom_call.1} parent=1 // pred_region
      _
    $region17: #{tpu_custom_call.1} parent=1 // pred_fallthru
      _
    // Predicated region
    $region18: #{tpu_custom_call.1} parent=1 // pred_check
      _
    $region19: #{tpu_custom_call.1} parent=1 // pred_check_branch
      %52 = sbr.rel (0) target = $region21
    $region20: #{tpu_custom_call.1} parent=1 // pred_region
      %53 = dma.done [#allocation3], 512
    $region21: #{tpu_custom_call.1} parent=1 // pred_fallthru
      _
    // Predicated region
    $region22: #{tpu_custom_call.1} parent=1 // pred_check
      _
    $region23: #{tpu_custom_call.1} parent=1 // pred_check_branch
      %55 = sbr.rel (0) target = $region25
    $region24: #{tpu_custom_call.1} parent=1 // pred_region
      %56 = dma.done [#allocation6], 32
    $region25: #{tpu_custom_call.1} parent=1 // pred_fallthru
      _
    // Predicated region
    $region26: #{tpu_custom_call.1} parent=1 // pred_check
      _
    $region27: #{tpu_custom_call.1} parent=1 // pred_check_branch
      %58 = sbr.rel (0) target = $region29
    $region28: #{tpu_custom_call.1} parent=1 // pred_region
      %59 = dma.done [#allocation6], 512
    $region29: #{tpu_custom_call.1} parent=1 // pred_fallthru
      _
    %v60 = vld [vmem:[#allocation2] sm:$0xff]
    %v61 = vld [vmem:[#allocation2 + $0x8] sm:$0xff]
    %v62 = vld [vmem:[#allocation2 + $0x10] sm:$0xff]
    %v63 = vld [vmem:[#allocation2 + $0x18] sm:$0xff]
    %v64 = vld [vmem:[#allocation7] sm:$0xff]
    %v65 = vld [vmem:[#allocation7 + $0x8] sm:$0xff]
    %v66 = vld [vmem:[#allocation7 + $0x10] sm:$0xff]
    %v67 = vld [vmem:[#allocation7 + $0x18] sm:$0xff]
    %vm68 = vcmask 261120
    %v70 = vsel %vm68, %v60, 0
    %v73 = vsel %vm68, %v61, 0
    %v76 = vsel %vm68, %v62, 0
    %v79 = vsel %vm68, %v63, 0
    %81 = vmatprep.subr.mxu0 0.0
    %82 = vmatpush1.msra.mxu0 0.0
    %83 = vmatprep.subr.mxu0 0.0
    %84 = vmatpush1.msra.mxu0 0.0
    %85 = vmatprep.subr.mxu0 0.0
    %86 = vmatpush1.msra.mxu0 0.0
    %87 = vmatprep.subr.mxu0 0.0
    %88 = vmatpush1.msra.mxu0 0.0
    %89 = vmatprep.subr.mxu0 0.0
    %90 = vmatpush1.msra.mxu0 0.0
    %91 = vmatprep.subr.mxu0 0.0
    %92 = vmatpush1.msra.mxu0 0.0
    %93 = vmatprep.subr.mxu0 0.0
    %94 = vmatpush1.msra.mxu0 0.0
    %95 = vmatprep.subr.mxu0 0.0
    %96 = vmatpush1.msra.mxu0 0.0
    %97 = vmatprep.subr.mxu0 0.0
    %98 = vmatpush1.msra.mxu0 0.0
    %99 = vmatprep.subr.mxu0 0.0
    %100 = vmatpush1.msra.mxu0 0.0
    %101 = vmatprep.subr.mxu0 0.0
    %102 = vmatpush1.msra.mxu0 0.0
    %103 = vmatprep.subr.mxu0 0.0
    %104 = vmatpush1.msra.mxu0 0.0
    %105 = vmatprep.subr.mxu0 0.0
    %106 = vmatpush1.msra.mxu0 %v67
    %107 = vmatprep.subr.mxu0 0.0
    %108 = vmatpush1.msra.mxu0 %v66
    %109 = vmatprep.subr.mxu0 0.0
    %110 = vmatpush1.msra.mxu0 %v65
    %111 = vmatprep.subr.mxu0 0.0
    %112 = vmatpush1.msra.mxu0 %v64
    %113 = vmatprep.subr.mxu0 0.0
    %114 = vmatpush2.msra.mxu0 0.0
    %115 = vmatprep.subr.mxu0 0.0
    %116 = vmatpush2.msra.mxu0 0.0
    %117 = vmatprep.subr.mxu0 0.0
    %118 = vmatpush2.msra.mxu0 0.0
    %119 = vmatprep.subr.mxu0 0.0
    %120 = vmatpush2.msra.mxu0 0.0
    %121 = vmatprep.subr.mxu0 0.0
    %122 = vmatpush2.msra.mxu0 0.0
    %123 = vmatprep.subr.mxu0 0.0
    %124 = vmatpush2.msra.mxu0 0.0
    %125 = vmatprep.subr.mxu0 0.0
    %126 = vmatpush2.msra.mxu0 0.0
    %127 = vmatprep.subr.mxu0 0.0
    %128 = vmatpush2.msra.mxu0 0.0
    %129 = vmatprep.subr.mxu0 0.0
    %130 = vmatpush2.msra.mxu0 0.0
    %131 = vmatprep.subr.mxu0 0.0
    %132 = vmatpush2.msra.mxu0 0.0
    %133 = vmatprep.subr.mxu0 0.0
    %134 = vmatpush2.msra.mxu0 0.0
    %135 = vmatprep.subr.mxu0 0.0
    %136 = vmatpush2.msra.mxu0 0.0
    %137 = vmatprep.subr.mxu0 0.0
    %138 = vmatpush2.msra.mxu0 0.0
    %139 = vmatprep.subr.mxu0 0.0
    %140 = vmatpush2.msra.mxu0 0.0
    %141 = vmatprep.subr.mxu0 0.0
    %142 = vmatpush2.msra.mxu0 0.0
    %143 = vmatprep.subr.mxu0 0.0
    %144 = vmatpush2.msra.mxu0 0.0
    %145 = vmatprep.mubr.f32.mxu0 0.0
    %146 = vmatmul.mubr.f32.gmra.mxu0 %v70
    %v147 = vpop.f32.mrf.mxu0
    %v148 = vadd.f32 0.0, %v147
    %v149 = vpop.f32.mrf.mxu0
    %150 = vmatprep.mubr.f32.mxu0 0.0
    %151 = vmatmul.mubr.f32.gmra.mxu0 %v73
    %v152 = vpop.f32.mrf.mxu0
    %v153 = vadd.f32 0.0, %v152
    %v154 = vpop.f32.mrf.mxu0
    %155 = vmatprep.mubr.f32.mxu0 0.0
    %156 = vmatmul.mubr.f32.gmra.mxu0 %v76
    %v157 = vpop.f32.mrf.mxu0
    %v158 = vadd.f32 0.0, %v157
    %v159 = vpop.f32.mrf.mxu0
    %160 = vmatprep.mubr.f32.mxu0 0.0
    %161 = vmatmul.mubr.f32.gmra.mxu0 %v79
    %v162 = vpop.f32.mrf.mxu0
    %v163 = vadd.f32 0.0, %v162
    %v164 = vpop.f32.mrf.mxu0
    %165 = vdwg.mxu0
    %v166 = vld [vmem:[#allocation5] sm:$0x3]
    %v169 = vunpack.c.l.s4 1966171168
    %v170 = vunpack.c.0.s8 %v169
    %v171 = vlaneseq
    %v172 = vshrl.u32 %v171, 7
    %v173 = vsub.s32 %v170, %v172
    %v174 = vrot.slane %v166, %v173
    %v175 = vcombine.high %v174, %v174
    %v177 = vunpack.c.l.s4 1966171168
    %v178 = vunpack.c.0.s8 %v177
    %v179 = vlaneseq
    %v180 = vshrl.u32 %v179, 7
    %v181 = vsub.s32 %v178, %v180
    %v182 = vrot.slane %v174, %v181
    %v184 = vunpack.c.l.s4 1966171168
    %v185 = vunpack.c.0.s8 %v184
    %v186 = vlaneseq
    %v187 = vshrl.u32 %v186, 7
    %v188 = vsub.s32 %v185, %v187
    %v189 = vrot.slane %v175, %v188
    %v190 = vlaneseq
    %v191 = vshrl.u32 %v190, 7
    %v192 = vsub.s32 0, %v191
    %v193 = vrot.slane %v182, %v192
    %v194 = vlaneseq
    %v195 = vshrl.u32 %v194, 7
    %v196 = vsub.s32 0, %v195
    %v197 = vrot.slane %v189, %v196
    %v200 = vadd.f32 %v148, %v193
    %v201 = vadd.f32 %v153, %v193
    %v202 = vadd.f32 %v158, %v197
    %v203 = vadd.f32 %v163, %v197
    %v204 = vmax.f32 %v200, 0.0
    %v205 = vmax.f32 %v201, 0.0
    %v206 = vmax.f32 %v202, 0.0
    %v207 = vmax.f32 %v203, 0.0
    %v208 = vld [vmem:[%s3] sm:$0x1]
    %v210 = vlaneseq
    %v211 = vshrl.u32 %v210, 7
    %v212 = vsub.s32 0, %v211
    %v213 = vrot.slane %v208, %v212
    %v215 = vmul.f32 %v204, %v213
    %v216 = vmul.f32 %v205, %v213
    %v217 = vmul.f32 %v206, %v213
    %v218 = vmul.f32 %v207, %v213
    %vm219 = vcmask 392192
    %v220 = vsel %vm219, %v215, 0.0
    %221 = vadd.xlane.f32.xlu0 %v220
    %v222 = vpop.xlane.xlu0 %221
    %v223 = vsel %vm219, %v216, 0.0
    %224 = vadd.xlane.f32.xlu0 %v223
    %v225 = vpop.xlane.xlu0 %224
    %v226 = vsel %vm219, %v217, 0.0
    %227 = vadd.xlane.f32.xlu0 %v226
    %v228 = vpop.xlane.xlu0 %227
    %v229 = vsel %vm219, %v218, 0.0
    %230 = vadd.xlane.f32.xlu0 %v229
    %v231 = vpop.xlane.xlu0 %230
    %v236 = vlaneseq
    %v237 = vand.u32 %v236, 127
    %v238 = vlaneseq
    %v239 = vshrl.u32 %v238, 7
    %v240 = vsub.s32 %v237, %v239
    %v241 = vrot.slane %v222, %v240
    %v242 = vadd.s32 %v237, 4294967288
    %v243 = vlaneseq
    %v244 = vshrl.u32 %v243, 7
    %v245 = vsub.s32 %v242, %v244
    %v246 = vrot.slane %v225, %v245
    %vm247 = vcmask 130112
    %v248 = vsel %vm247, %v246, %v241
    %v249 = vlaneseq
    %v250 = vshrl.u32 %v249, 7
    %v251 = vsub.s32 %v237, %v250
    %v252 = vrot.slane %v228, %v251
    %v253 = vlaneseq
    %v254 = vshrl.u32 %v253, 7
    %v255 = vsub.s32 %v242, %v254
    %v256 = vrot.slane %v231, %v255
    %v257 = vsel %vm247, %v256, %v252
    %vm258 = vcmask 1041409
    %v259 = vsel %vm258, %v257, %v248
    %vm261 = vcmask 123904
    %v262 = vsel %vm261, %v259, -inf
    %263 = vmax.xlane.f32.xlu0 %v262
    %v264 = vpop.xlane.xlu0 %263
    %v266 = vlaneseq
    %v267 = vshrl.u32 %v266, 7
    %v268 = vsub.s32 0, %v267
    %v269 = vrot.slane %v264, %v268
    %v270 = vlaneseq
    %v271 = vshrl.u32 %v270, 7
    %v272 = vsub.s32 1, %v271
    %v273 = vrot.slane %v264, %v272
    %v276 = vsub.f32 %v222, %v269
    %v277 = vsub.f32 %v225, %v269
    %v278 = vsub.f32 %v228, %v273
    %v279 = vsub.f32 %v231, %v273
    %v280 = vmul.f32 %v276, 1.442695
    %v281 = vpow.pop %v280
    %v282 = vmul.f32 %v277, 1.442695
    %v283 = vpow.pop %v282
    %v284 = vmul.f32 %v278, 1.442695
    %v285 = vpow.pop %v284
    %v286 = vmul.f32 %v279, 1.442695
    %v287 = vpow.pop %v286
    %292 = vset.pattern.permute.xlu0 0
    %293 = vperm.xlu0 %292, %v281
    %v294 = vpop.permute.xlu0 %293
    %295 = vset.pattern.permute.xlu0 0
    %296 = vperm.xlu0 %295, %v283
    %v297 = vpop.permute.xlu0 %296
    %298 = vset.pattern.permute.xlu0 0
    %299 = vperm.xlu0 %298, %v285
    %v300 = vpop.permute.xlu0 %299
    %301 = vset.pattern.permute.xlu0 0
    %302 = vperm.xlu0 %301, %v287
    %v303 = vpop.permute.xlu0 %302
    %v304 = vlaneseq
    %v305 = vshrl.u32 %v304, 7
    %v306 = vsub.s32 %v237, %v305
    %v307 = vrot.slane %v294, %v306
    %v308 = vlaneseq
    %v309 = vshrl.u32 %v308, 7
    %v310 = vsub.s32 %v242, %v309
    %v311 = vrot.slane %v297, %v310
    %v312 = vsel %vm247, %v311, %v307
    %v313 = vlaneseq
    %v314 = vshrl.u32 %v313, 7
    %v315 = vsub.s32 %v237, %v314
    %v316 = vrot.slane %v300, %v315
    %v317 = vlaneseq
    %v318 = vshrl.u32 %v317, 7
    %v319 = vsub.s32 %v242, %v318
    %v320 = vrot.slane %v303, %v319
    %v321 = vsel %vm247, %v320, %v316
    %v322 = vsel %vm258, %v321, %v312
    %v324 = vsel %vm261, %v322, 0.0
    %325 = vadd.xlane.f32.xlu0 %v324
    %v326 = vpop.xlane.xlu0 %325
    %v327 = vrcp.pop %v326
    %v329 = vlaneseq
    %v330 = vshrl.u32 %v329, 7
    %v331 = vsub.s32 0, %v330
    %v332 = vrot.slane %v327, %v331
    %v333 = vlaneseq
    %v334 = vshrl.u32 %v333, 7
    %v335 = vsub.s32 1, %v334
    %v336 = vrot.slane %v327, %v335
    %v339 = vmul.f32 %v281, %v332
    %v340 = vmul.f32 %v283, %v332
    %v341 = vmul.f32 %v285, %v336
    %v342 = vmul.f32 %v287, %v336
    %344 = vset.pattern.permute.xlu0 0
    %345 = vperm.xlu0 %344, %v339
    %v346 = vpop.permute.xlu0 %345
    %349 = vset.pattern.permute.xlu0 0
    %350 = vperm.xlu0 %349, %v340
    %v351 = vpop.permute.xlu0 %350
    %354 = vset.pattern.permute.xlu0 0
    %355 = vperm.xlu0 %354, %v341
    %v356 = vpop.permute.xlu0 %355
    %359 = vset.pattern.permute.xlu0 0
    %360 = vperm.xlu0 %359, %v342
    %v361 = vpop.permute.xlu0 %360
    %v363 = vmul.f32 %v60, %v346
    %v364 = vmul.f32 %v61, %v351
    %v365 = vmul.f32 %v62, %v356
    %v366 = vmul.f32 %v63, %v361
    %v367 = vsel %vm68, %v363, 0.0
    %v368 = vsel %vm68, %v364, 0.0
    %v369 = vadd.f32 %v367, %v368
    %v370 = vrot.slane %v369, 4
    %v371 = vadd.f32 %v369, %v370
    %v372 = vrot.slane %v371, 2
    %v373 = vadd.f32 %v371, %v372
    %v374 = vrot.slane %v373, 1
    %v375 = vadd.f32 %v373, %v374
    %v376 = vsel %vm68, %v365, 0.0
    %v377 = vsel %vm68, %v366, 0.0
    %v378 = vadd.f32 %v376, %v377
    %v379 = vrot.slane %v378, 4
    %v380 = vadd.f32 %v378, %v379
    %v381 = vrot.slane %v380, 2
    %v382 = vadd.f32 %v380, %v381
    %v383 = vrot.slane %v382, 1
    %v384 = vadd.f32 %v382, %v383
    %v387 = vsel %vm258, %v384, %v375
    %vm389 = vcmask 254976
    %390 = vst.msk [vmem:[#allocation8] sm:$0x3] %vm389, %v387
    %v391 = vlaneseq
    %v392 = vshrl.u32 %v391, 7
    %v393 = vsub.s32 %v237, %v392
    %v394 = vrot.slane %v346, %v393
    %v395 = vlaneseq
    %v396 = vshrl.u32 %v395, 7
    %v397 = vsub.s32 %v242, %v396
    %v398 = vrot.slane %v351, %v397
    %v399 = vsel %vm247, %v398, %v394
    %v400 = vlaneseq
    %v401 = vshrl.u32 %v400, 7
    %v402 = vsub.s32 %v237, %v401
    %v403 = vrot.slane %v356, %v402
    %v404 = vlaneseq
    %v405 = vshrl.u32 %v404, 7
    %v406 = vsub.s32 %v242, %v405
    %v407 = vrot.slane %v361, %v406
    %v408 = vsel %vm247, %v407, %v403
    %v409 = vsel %vm258, %v408, %v399
    %411 = vst.msk [vmem:[#allocation9] sm:$0x3] %vm261, %v409
    // Predicated region
    $region30: #{tpu_custom_call.1} parent=1 // pred_check
      _
    $region31: #{tpu_custom_call.1} parent=1 // pred_check_branch
      %413 = sbr.rel (0) target = $region33
    $region32: #{tpu_custom_call.1} parent=1 // pred_region
      %s415 = ssub.s32 32, 32
      %416 = vsyncadd [#allocation4], %s415
      %s418 = sshll.u32 [#allocation8], 4
      %s419 = int_to_ptr.vmem [resolvable:$true] %s418
      %421 = dma.vmem_to_hbm [thread:$0]  %s419, 32, %s4, [#allocation4]
    $region33: #{tpu_custom_call.1} parent=1 // pred_fallthru
      _
    // Predicated region
    $region34: #{tpu_custom_call.1} parent=1 // pred_check
      _
    $region35: #{tpu_custom_call.1} parent=1 // pred_check_branch
      %423 = sbr.rel (0) target = $region37
    $region36: #{tpu_custom_call.1} parent=1 // pred_region
      %s425 = ssub.s32 32, 32
      %426 = vsyncadd [#allocation10], %s425
      %s428 = sshll.u32 [#allocation9], 4
      %s429 = int_to_ptr.vmem [resolvable:$true] %s428
      %431 = dma.vmem_to_hbm [thread:$0]  %s429, 32, %s5, [#allocation10]
    $region37: #{tpu_custom_call.1} parent=1 // pred_fallthru
      _
    // Predicated region
    $region38: #{tpu_custom_call.1} parent=1 // pred_check
      _
    $region39: #{tpu_custom_call.1} parent=1 // pred_check_branch
      %433 = sbr.rel (0) target = $region41
    $region40: #{tpu_custom_call.1} parent=1 // pred_region
      %434 = dma.done [#allocation4], 32
    $region41: #{tpu_custom_call.1} parent=1 // pred_fallthru
      _
    // Predicated region
    $region42: #{tpu_custom_call.1} parent=1 // pred_check
      _
    $region43: #{tpu_custom_call.1} parent=1 // pred_check_branch
      %436 = sbr.rel (0) target = $region45
    $region44: #{tpu_custom_call.1} parent=1 // pred_region
      %437 = dma.done [#allocation10], 32
    $region45: #{tpu_custom_call.1} parent=1 // pred_fallthru
      _
    %438 = vsyncpa [#allocation3], 1
    %439 = vsyncpa [#allocation6], 1
    %440 = vsyncpa [#allocation4], 1
    %441 = vsyncpa [#allocation10], 1

</llo_original>
